<compile_context>
chip_gen: v7x
topology: tpu7x:2x2x1
jax: 0.10.0
libtpu: 0.0.40
codegen_flags: <defaults>
</compile_context>

<pallas_src>
import functools

import numpy as np
import jax
import jax.numpy as jnp
from jax.experimental import pallas as pl
from jax.experimental.pallas import tpu as pltpu


# ------------------------------ fused kernel --------------------------------


def _bottleneck_kernel(x_ref, w1_ref, b1_ref, w2_ref, m_ref, b2_ref,
                       w3_ref, b3_ref, o_ref, *, W):
    b_tile, _, hw = x_ref.shape          # block = (B_tile, Cin, HW_pad)
    cdt = x_ref.dtype                    # compute dtype (no upcast of MXU operands)

    # Weights / biases read once per grid step, reused for every image in the tile.
    w1 = w1_ref[...]                     # (Cmid, Cin)        BN scale pre-folded
    w2 = w2_ref[...]                     # (Cmid, 9*Cmid)     concat-K layout
    w3 = w3_ref[...]                     # (Cout, Cmid)
    b1 = b1_ref[...]                     # (Cmid, 1) f32
    b2 = b2_ref[...]                     # (Cmid, 1) f32
    b3 = b3_ref[...]                     # (Cout, 1) f32

    for b in range(b_tile):              # static unroll over the in-step batch
        xb = x_ref[b]                    # (Cin, HW) input dtype

        # ---- stage 1: 1x1 conv (+ folded BN scale) + bias + ReLU ----
        h1 = jnp.dot(w1, xb, preferred_element_type=jnp.float32)
        h1 = jnp.maximum(h1 + b1, 0.0).astype(cdt)            # (Cmid, HW)

        # ---- stage 2: 3x3 conv (padding=1) as ONE K=9*Cmid MXU matmul ----
        # Each tap is a lane rotation (XLU) of the flat spatial axis by dy*W + dx;
        # wrapped / out-of-image lanes are zeroed by precomputed 0/1 masks, which
        # reproduces zero padding exactly (padded HW lanes are masked off too).
        parts = []
        for dy in (-1, 0, 1):
            for dx in (-1, 0, 1):
                s = dy * W + dx
                if s == 0:
                    parts.append(h1)
                else:
                    tap = (dy + 1) * 3 + (dx + 1)
                    parts.append(pltpu.roll(h1, (-s) % hw, 1) * m_ref[tap])
        stack = jnp.concatenate(parts, axis=0)                 # (9*Cmid, HW)
        h2 = jnp.dot(w2, stack, preferred_element_type=jnp.float32)
        h2 = jnp.maximum(h2 + b2, 0.0).astype(cdt)             # (Cmid, HW)

        # ---- stage 3: 1x1 conv + bias + residual (residual never leaves VMEM) ----
        out = jnp.dot(w3, h2, preferred_element_type=jnp.float32)
        out = out + b3 + xb.astype(jnp.float32)
        o_ref[b] = out.astype(o_ref.dtype)


# ------------------------------ host wrapper ---------------------------------


def _tap_masks(H, W, hw_pad, dtype):
    """(9, 1, HW_pad) 0/1 masks: 1 iff the tap's source pixel is inside the image.

    Padded lanes (>= H*W) are 0, so padded garbage never leaks into valid lanes."""
    y = np.arange(H)[:, None]
    x = np.arange(W)[None, :]
    m = np.zeros((9, 1, hw_pad), np.float32)
    for dy in (-1, 0, 1):
        for dx in (-1, 0, 1):
            valid = (y + dy >= 0) & (y + dy < H) & (x + dx >= 0) & (x + dx < W)
            m[(dy + 1) * 3 + (dx + 1), 0, :H * W] = valid.reshape(-1)
    return jnp.asarray(m, dtype)


def _pick_batch_tile(N, per_image_vmem, budget=12 << 20):
    """Largest divisor of N fitting the VMEM budget, keeping >= 2 grid steps (megacore)."""
    best = 1
    for bt in range(1, N + 1):
        if N % bt:
            continue
        if bt * per_image_vmem > budget:
            continue
        if N >= 2 and N // bt < 2:
            continue
        best = bt
    return best


def bottleneck_forward(x_nchw, params):
    N, Cin, H, W = x_nchw.shape
    Cmid = params['w1'].shape[0]
    Cout = params['w3'].shape[0]
    assert Cin == Cout, "residual add requires in_channels == out_channels"
    HW = H * W
    hw_pad = -(-HW // 128) * 128                 # lane-dense (unmasked) stores
    itemsize = jnp.dtype(x_nchw.dtype).itemsize

    x3 = x_nchw.reshape(N, Cin, HW)              # free reshape: no transpose
    if hw_pad != HW:
        x3 = jnp.pad(x3, ((0, 0), (0, 0), (0, hw_pad - HW)))

    masks = _tap_masks(H, W, hw_pad, x_nchw.dtype)

    per_image_vmem = hw_pad * ((Cin + Cout) * itemsize * 2        # x/out double-buffered
                               + (Cin + 11 * Cmid + Cout) * 4)    # intermediates (h1/stack/h2/...)
    b_tile = _pick_batch_tile(N, per_image_vmem)

    flops = 2 * N * HW * (Cin * Cmid + 9 * Cmid * Cmid + Cmid * Cout)
    param_bytes = sum(int(np.prod(params[k].shape)) * jnp.dtype(params[k].dtype).itemsize
                      for k in ('w1', 'b1', 'w2', 'b2', 'w3', 'b3'))
    bytes_accessed = (2 * N * Cin * hw_pad * itemsize            # x in + out
                      + param_bytes + masks.size * itemsize)

    kern = functools.partial(_bottleneck_kernel, W=W)
    out3 = pl.pallas_call(
        kern,
        out_shape=jax.ShapeDtypeStruct((N, Cout, hw_pad), x_nchw.dtype),
        grid=(N // b_tile,),
        in_specs=[
            pl.BlockSpec((b_tile, Cin, hw_pad), lambda n: (n, 0, 0)),   # x (batch tile)
            pl.BlockSpec((Cmid, Cin), lambda n: (0, 0)),                # w1 (BN folded)
            pl.BlockSpec((Cmid, 1), lambda n: (0, 0)),                  # b1
            pl.BlockSpec((Cmid, 9 * Cmid), lambda n: (0, 0)),           # w2 (concat-K, BN folded)
            pl.BlockSpec((9, 1, hw_pad), lambda n: (0, 0, 0)),          # border masks
            pl.BlockSpec((Cmid, 1), lambda n: (0, 0)),                  # b2
            pl.BlockSpec((Cout, Cmid), lambda n: (0, 0)),               # w3 (BN folded)
            pl.BlockSpec((Cout, 1), lambda n: (0, 0)),                  # b3
        ],
        out_specs=pl.BlockSpec((b_tile, Cout, hw_pad), lambda n: (n, 0, 0)),
        compiler_params=pltpu.CompilerParams(
            dimension_semantics=("parallel",)),
        cost_estimate=pl.CostEstimate(flops=flops, transcendentals=0,
                                      bytes_accessed=bytes_accessed),
    )(x3, params['w1'], params['b1'], params['w2'], masks,
      params['b2'], params['w3'], params['b3'])

    return out3[:, :, :HW].reshape(N, Cout, H, W)


# ----------------------------- parameter setup -------------------------------


def init_raw_params(key, in_channels, out_channels, reduction=4):
    """PyTorch-layout parameters: conv weights/biases + BN (gamma, beta, mean, var)."""
    mid = in_channels // reduction
    k = jax.random.split(key, 9)

    def bn_stats(kk, c):
        kg, kb, km, kv = jax.random.split(kk, 4)
        gamma = 1.0 + 0.1 * jax.random.normal(kg, (c,), jnp.float32)
        beta = 0.1 * jax.random.normal(kb, (c,), jnp.float32)
        mean = 0.05 * jax.random.normal(km, (c,), jnp.float32)
        var = jnp.abs(1.0 + 0.1 * jax.random.normal(kv, (c,), jnp.float32))
        return (gamma, beta, mean, var)

    return {
        'conv1_w': 0.1 * jax.random.normal(k[0], (mid, in_channels, 1, 1), jnp.float32),
        'conv1_b': 0.1 * jax.random.normal(k[1], (mid,), jnp.float32),
        'bn1': bn_stats(k[2], mid),
        'conv2_w': 0.1 * jax.random.normal(k[3], (mid, mid, 3, 3), jnp.float32),
        'conv2_b': 0.1 * jax.random.normal(k[4], (mid,), jnp.float32),
        'bn2': bn_stats(k[5], mid),
        'conv3_w': 0.1 * jax.random.normal(k[6], (out_channels, mid, 1, 1), jnp.float32),
        'conv3_b': 0.1 * jax.random.normal(k[7], (out_channels,), jnp.float32),
        'bn3': bn_stats(k[8], out_channels),
    }


def fold_params(raw, compute_dtype=jnp.float32, eps=1e-5):
    """Fold inference-mode BN: scale into the conv weights, everything else into a bias."""
    def fold(w4, cb, bn):
        gamma, beta, mean, var = bn
        s = gamma / jnp.sqrt(var + eps)
        return w4 * s[:, None, None, None], beta + s * (cb - mean)

    w1, b1 = fold(raw['conv1_w'], raw['conv1_b'], raw['bn1'])
    w2, b2 = fold(raw['conv2_w'], raw['conv2_b'], raw['bn2'])
    w3, b3 = fold(raw['conv3_w'], raw['conv3_b'], raw['bn3'])
    mid = w1.shape[0]
    return {
        'w1': w1[:, :, 0, 0].astype(compute_dtype),
        'b1': b1[:, None].astype(jnp.float32),
        # (O, I, ky, kx) -> (O, ky, kx, I) -> (O, 9*I): column index = tap*I + i,
        # matching the in-kernel concat order [tap0 channels, tap1 channels, ...].
        'w2': jnp.transpose(w2, (0, 2, 3, 1)).reshape(mid, 9 * mid).astype(compute_dtype),
        'b2': b2[:, None].astype(jnp.float32),
        'w3': w3[:, :, 0, 0].astype(compute_dtype),
        'b3': b3[:, None].astype(jnp.float32),
    }


# ------------------------------ pure-JAX reference ---------------------------


def bottleneck_reference(x, raw, eps=1e-5):
    """Direct replica of the PyTorch module (eval-mode BN) on the raw parameters."""
    def conv(x, w, b, pad):
        y = jax.lax.conv_general_dilated(
            x, w, window_strides=(1, 1), padding=[(pad, pad), (pad, pad)],
            dimension_numbers=('NCHW', 'OIHW', 'NCHW'),
            precision=jax.lax.Precision.HIGHEST)
        return y + b[None, :, None, None]

    def bn(x, stats):
        gamma, beta, mean, var = stats
        inv = gamma / jnp.sqrt(var + eps)
        return (x - mean[None, :, None, None]) * inv[None, :, None, None] \
               + beta[None, :, None, None]

    h = jax.nn.relu(bn(conv(x, raw['conv1_w'], raw['conv1_b'], 0), raw['bn1']))
    h = jax.nn.relu(bn(conv(h, raw['conv2_w'], raw['conv2_b'], 1), raw['bn2']))
    h = bn(conv(h, raw['conv3_w'], raw['conv3_b'], 0), raw['bn3'])
    return h + x


if __name__ == "__main__":
    key = jax.random.PRNGKey(0)
    kx, kp, kx2 = jax.random.split(key, 3)

    # in_channels = out_channels = 16, reduction = 4 -> Cmid = 4
    N, C, H, W = 2, 16, 16, 16
    x = jax.random.normal(kx, (N, C, H, W), jnp.float32)
    raw = init_raw_params(kp, in_channels=C, out_channels=C, reduction=4)
    kparams = fold_params(raw, compute_dtype=x.dtype)

    fwd = jax.jit(bottleneck_forward)

    out = jax.block_until_ready(fwd(x, kparams))
    ref = bottleneck_reference(x, raw)
    assert out.shape == (N, C, H, W)
    assert jnp.allclose(out, ref, rtol=1e-4, atol=1e-4), "mismatch vs reference (N=2)"

    # Second check exercising B_tile > 1 (two images folded into one grid step).
    x2 = jax.random.normal(kx2, (4, C, H, W), jnp.float32)
    out2 = jax.block_until_ready(fwd(x2, kparams))
    ref2 = bottleneck_reference(x2, raw)
    assert jnp.allclose(out2, ref2, rtol=1e-4, atol=1e-4), "mismatch vs reference (N=4)"

    print("KERNEL_OK")
</pallas_src>

<mosaic_0001>
module attributes {stable_mosaic.version = 11 : i64} {
  func.func @_bottleneck_kernel(%arg0: i32, %arg1: memref<1x16x256xf32, #tpu.memory_space<vmem>>, %arg2: memref<4x16xf32, #tpu.memory_space<vmem>>, %arg3: memref<4x1xf32, #tpu.memory_space<vmem>>, %arg4: memref<4x36xf32, #tpu.memory_space<vmem>>, %arg5: memref<9x1x256xf32, #tpu.memory_space<vmem>>, %arg6: memref<4x1xf32, #tpu.memory_space<vmem>>, %arg7: memref<16x4xf32, #tpu.memory_space<vmem>>, %arg8: memref<16x1xf32, #tpu.memory_space<vmem>>, %arg9: memref<1x16x256xf32, #tpu.memory_space<vmem>>) attributes {dimension_semantics = [#tpu.dimension_semantics<parallel>], iteration_bounds = array<i64: 2>, scalar_prefetch = 0 : i64, scratch_operands = 0 : i64, tpu.core_type = #tpu.core_type<tc>, window_params = [{transform_indices = @transform_0, window_bounds = array<i64: 1, 16, 256>}, {pipeline_mode = #tpu.pipeline_mode<synchronous>, transform_indices = @transform_1, window_bounds = array<i64: 4, 16>}, {pipeline_mode = #tpu.pipeline_mode<synchronous>, transform_indices = @transform_2, window_bounds = array<i64: 4, 1>}, {pipeline_mode = #tpu.pipeline_mode<synchronous>, transform_indices = @transform_3, window_bounds = array<i64: 4, 36>}, {pipeline_mode = #tpu.pipeline_mode<synchronous>, transform_indices = @transform_4, window_bounds = array<i64: 9, 1, 256>}, {pipeline_mode = #tpu.pipeline_mode<synchronous>, transform_indices = @transform_5, window_bounds = array<i64: 4, 1>}, {pipeline_mode = #tpu.pipeline_mode<synchronous>, transform_indices = @transform_6, window_bounds = array<i64: 16, 4>}, {pipeline_mode = #tpu.pipeline_mode<synchronous>, transform_indices = @transform_7, window_bounds = array<i64: 16, 1>}, {transform_indices = @transform_8, window_bounds = array<i64: 1, 16, 256>}]} {
    %c0 = arith.constant 0 : index
    %c0_0 = arith.constant 0 : index
    %0 = vector.load %arg2[%c0, %c0_0] : memref<4x16xf32, #tpu.memory_space<vmem>>, vector<4x16xf32>
    %c0_1 = arith.constant 0 : index
    %c0_2 = arith.constant 0 : index
    %1 = vector.load %arg4[%c0_1, %c0_2] : memref<4x36xf32, #tpu.memory_space<vmem>>, vector<4x36xf32>
    %c0_3 = arith.constant 0 : index
    %c0_4 = arith.constant 0 : index
    %2 = vector.load %arg7[%c0_3, %c0_4] : memref<16x4xf32, #tpu.memory_space<vmem>>, vector<16x4xf32>
    %c0_5 = arith.constant 0 : index
    %c0_6 = arith.constant 0 : index
    %3 = vector.load %arg3[%c0_5, %c0_6] : memref<4x1xf32, #tpu.memory_space<vmem>>, vector<4x1xf32>
    %c0_7 = arith.constant 0 : index
    %c0_8 = arith.constant 0 : index
    %4 = vector.load %arg6[%c0_7, %c0_8] : memref<4x1xf32, #tpu.memory_space<vmem>>, vector<4x1xf32>
    %c0_9 = arith.constant 0 : index
    %c0_10 = arith.constant 0 : index
    %5 = vector.load %arg8[%c0_9, %c0_10] : memref<16x1xf32, #tpu.memory_space<vmem>>, vector<16x1xf32>
    %c0_11 = arith.constant 0 : index
    %c0_12 = arith.constant 0 : index
    %c0_13 = arith.constant 0 : index
    %6 = vector.load %arg1[%c0_11, %c0_12, %c0_13] : memref<1x16x256xf32, #tpu.memory_space<vmem>>, vector<1x16x256xf32>
    %7 = vector.shape_cast %6 : vector<1x16x256xf32> to vector<16x256xf32>
    %cst = arith.constant dense<0.000000e+00> : vector<4x256xf32>
    %8 = tpu.matmul %0, %7, %cst {dimension_numbers = #tpu.dot_dimension_numbers<[1], [0], [0], [1], [0, 0, 1, 1], [], []>} : vector<4x16xf32>, vector<16x256xf32>, vector<4x256xf32> -> vector<4x256xf32>
    %9 = vector.broadcast %3 : vector<4x1xf32> to vector<4x256xf32>
    %10 = arith.addf %8, %9 : vector<4x256xf32>
    %cst_14 = arith.constant 0.000000e+00 : f32
    %11 = vector.broadcast %cst_14 : f32 to vector<4x256xf32>
    %12 = arith.maximumf %10, %11 : vector<4x256xf32>
    %c17_i32 = arith.constant 17 : i32
    %13 = tpu.dynamic_rotate %12 by %c17_i32 dim 1 : vector<4x256xf32>, i32 -> vector<4x256xf32>
    %c0_15 = arith.constant 0 : index
    %c0_16 = arith.constant 0 : index
    %c0_17 = arith.constant 0 : index
    %14 = vector.load %arg5[%c0_15, %c0_16, %c0_17] : memref<9x1x256xf32, #tpu.memory_space<vmem>>, vector<1x1x256xf32>
    %15 = vector.shape_cast %14 : vector<1x1x256xf32> to vector<1x256xf32>
    %16 = vector.broadcast %15 : vector<1x256xf32> to vector<4x256xf32>
    %17 = arith.mulf %13, %16 : vector<4x256xf32>
    %c16_i32 = arith.constant 16 : i32
    %18 = tpu.dynamic_rotate %12 by %c16_i32 dim 1 : vector<4x256xf32>, i32 -> vector<4x256xf32>
    %c1 = arith.constant 1 : index
    %c0_18 = arith.constant 0 : index
    %c0_19 = arith.constant 0 : index
    %19 = vector.load %arg5[%c1, %c0_18, %c0_19] : memref<9x1x256xf32, #tpu.memory_space<vmem>>, vector<1x1x256xf32>
    %20 = vector.shape_cast %19 : vector<1x1x256xf32> to vector<1x256xf32>
    %21 = vector.broadcast %20 : vector<1x256xf32> to vector<4x256xf32>
    %22 = arith.mulf %18, %21 : vector<4x256xf32>
    %c15_i32 = arith.constant 15 : i32
    %23 = tpu.dynamic_rotate %12 by %c15_i32 dim 1 : vector<4x256xf32>, i32 -> vector<4x256xf32>
    %c2 = arith.constant 2 : index
    %c0_20 = arith.constant 0 : index
    %c0_21 = arith.constant 0 : index
    %24 = vector.load %arg5[%c2, %c0_20, %c0_21] : memref<9x1x256xf32, #tpu.memory_space<vmem>>, vector<1x1x256xf32>
    %25 = vector.shape_cast %24 : vector<1x1x256xf32> to vector<1x256xf32>
    %26 = vector.broadcast %25 : vector<1x256xf32> to vector<4x256xf32>
    %27 = arith.mulf %23, %26 : vector<4x256xf32>
    %c1_i32 = arith.constant 1 : i32
    %28 = tpu.dynamic_rotate %12 by %c1_i32 dim 1 : vector<4x256xf32>, i32 -> vector<4x256xf32>
    %c3 = arith.constant 3 : index
    %c0_22 = arith.constant 0 : index
    %c0_23 = arith.constant 0 : index
    %29 = vector.load %arg5[%c3, %c0_22, %c0_23] : memref<9x1x256xf32, #tpu.memory_space<vmem>>, vector<1x1x256xf32>
    %30 = vector.shape_cast %29 : vector<1x1x256xf32> to vector<1x256xf32>
    %31 = vector.broadcast %30 : vector<1x256xf32> to vector<4x256xf32>
    %32 = arith.mulf %28, %31 : vector<4x256xf32>
    %c255_i32 = arith.constant 255 : i32
    %33 = tpu.dynamic_rotate %12 by %c255_i32 dim 1 : vector<4x256xf32>, i32 -> vector<4x256xf32>
    %c5 = arith.constant 5 : index
    %c0_24 = arith.constant 0 : index
    %c0_25 = arith.constant 0 : index
    %34 = vector.load %arg5[%c5, %c0_24, %c0_25] : memref<9x1x256xf32, #tpu.memory_space<vmem>>, vector<1x1x256xf32>
    %35 = vector.shape_cast %34 : vector<1x1x256xf32> to vector<1x256xf32>
    %36 = vector.broadcast %35 : vector<1x256xf32> to vector<4x256xf32>
    %37 = arith.mulf %33, %36 : vector<4x256xf32>
    %c241_i32 = arith.constant 241 : i32
    %38 = tpu.dynamic_rotate %12 by %c241_i32 dim 1 : vector<4x256xf32>, i32 -> vector<4x256xf32>
    %c6 = arith.constant 6 : index
    %c0_26 = arith.constant 0 : index
    %c0_27 = arith.constant 0 : index
    %39 = vector.load %arg5[%c6, %c0_26, %c0_27] : memref<9x1x256xf32, #tpu.memory_space<vmem>>, vector<1x1x256xf32>
    %40 = vector.shape_cast %39 : vector<1x1x256xf32> to vector<1x256xf32>
    %41 = vector.broadcast %40 : vector<1x256xf32> to vector<4x256xf32>
    %42 = arith.mulf %38, %41 : vector<4x256xf32>
    %c240_i32 = arith.constant 240 : i32
    %43 = tpu.dynamic_rotate %12 by %c240_i32 dim 1 : vector<4x256xf32>, i32 -> vector<4x256xf32>
    %c7 = arith.constant 7 : index
    %c0_28 = arith.constant 0 : index
    %c0_29 = arith.constant 0 : index
    %44 = vector.load %arg5[%c7, %c0_28, %c0_29] : memref<9x1x256xf32, #tpu.memory_space<vmem>>, vector<1x1x256xf32>
    %45 = vector.shape_cast %44 : vector<1x1x256xf32> to vector<1x256xf32>
    %46 = vector.broadcast %45 : vector<1x256xf32> to vector<4x256xf32>
    %47 = arith.mulf %43, %46 : vector<4x256xf32>
    %c239_i32 = arith.constant 239 : i32
    %48 = tpu.dynamic_rotate %12 by %c239_i32 dim 1 : vector<4x256xf32>, i32 -> vector<4x256xf32>
    %c8 = arith.constant 8 : index
    %c0_30 = arith.constant 0 : index
    %c0_31 = arith.constant 0 : index
    %49 = vector.load %arg5[%c8, %c0_30, %c0_31] : memref<9x1x256xf32, #tpu.memory_space<vmem>>, vector<1x1x256xf32>
    %50 = vector.shape_cast %49 : vector<1x1x256xf32> to vector<1x256xf32>
    %51 = vector.broadcast %50 : vector<1x256xf32> to vector<4x256xf32>
    %52 = arith.mulf %48, %51 : vector<4x256xf32>
    %53 = tpu.concatenate %17, %22, %27, %32, %12, %37, %42, %47, %52 in 0 : vector<4x256xf32>, vector<4x256xf32>, vector<4x256xf32>, vector<4x256xf32>, vector<4x256xf32>, vector<4x256xf32>, vector<4x256xf32>, vector<4x256xf32>, vector<4x256xf32> -> vector<36x256xf32>
    %cst_32 = arith.constant dense<0.000000e+00> : vector<4x256xf32>
    %54 = tpu.matmul %1, %53, %cst_32 {dimension_numbers = #tpu.dot_dimension_numbers<[1], [0], [0], [1], [0, 0, 1, 1], [], []>} : vector<4x36xf32>, vector<36x256xf32>, vector<4x256xf32> -> vector<4x256xf32>
    %55 = vector.broadcast %4 : vector<4x1xf32> to vector<4x256xf32>
    %56 = arith.addf %54, %55 : vector<4x256xf32>
    %cst_33 = arith.constant 0.000000e+00 : f32
    %57 = vector.broadcast %cst_33 : f32 to vector<4x256xf32>
    %58 = arith.maximumf %56, %57 : vector<4x256xf32>
    %cst_34 = arith.constant dense<0.000000e+00> : vector<16x256xf32>
    %59 = tpu.matmul %2, %58, %cst_34 {dimension_numbers = #tpu.dot_dimension_numbers<[1], [0], [0], [1], [0, 0, 1, 1], [], []>} : vector<16x4xf32>, vector<4x256xf32>, vector<16x256xf32> -> vector<16x256xf32>
    %60 = vector.broadcast %5 : vector<16x1xf32> to vector<16x256xf32>
    %61 = arith.addf %59, %60 : vector<16x256xf32>
    %62 = arith.addf %61, %7 : vector<16x256xf32>
    %c0_35 = arith.constant 0 : index
    %c0_36 = arith.constant 0 : index
    %c0_37 = arith.constant 0 : index
    %63 = vector.load %arg9[%c0_35, %c0_36, %c0_37] : memref<1x16x256xf32, #tpu.memory_space<vmem>>, vector<1x16x256xf32>
    %64 = vector.shape_cast %63 : vector<1x16x256xf32> to vector<16x256xf32>
    %65 = vector.shape_cast %62 : vector<16x256xf32> to vector<1x16x256xf32>
    tpu.vector_store %arg9[%c0_35, %c0_36, %c0_37], %65 {strides = array<i32>} : memref<1x16x256xf32, #tpu.memory_space<vmem>>, vector<1x16x256xf32>,
    return
  }
  func.func @transform_0(%arg0: i32) -> (i32, i32, i32) {
    %c0_i32 = arith.constant 0 : i32
    %c0_i32_0 = arith.constant 0 : i32
    %c0_i32_1 = arith.constant 0 : i32
    return %arg0, %c0_i32, %c0_i32_0 : i32, i32, i32
  }
  func.func @transform_1(%arg0: i32) -> (i32, i32) {
    %c0_i32 = arith.constant 0 : i32
    %c0_i32_0 = arith.constant 0 : i32
    %c0_i32_1 = arith.constant 0 : i32
    return %c0_i32, %c0_i32_0 : i32, i32
  }
  func.func @transform_2(%arg0: i32) -> (i32, i32) {
    %c0_i32 = arith.constant 0 : i32
    %c0_i32_0 = arith.constant 0 : i32
    %c0_i32_1 = arith.constant 0 : i32
    return %c0_i32, %c0_i32_0 : i32, i32
  }
  func.func @transform_3(%arg0: i32) -> (i32, i32) {
    %c0_i32 = arith.constant 0 : i32
    %c0_i32_0 = arith.constant 0 : i32
    %c0_i32_1 = arith.constant 0 : i32
    return %c0_i32, %c0_i32_0 : i32, i32
  }
  func.func @transform_4(%arg0: i32) -> (i32, i32, i32) {
    %c0_i32 = arith.constant 0 : i32
    %c0_i32_0 = arith.constant 0 : i32
    %c0_i32_1 = arith.constant 0 : i32
    %c0_i32_2 = arith.constant 0 : i32
    return %c0_i32, %c0_i32_0, %c0_i32_1 : i32, i32, i32
  }
  func.func @transform_5(%arg0: i32) -> (i32, i32) {
    %c0_i32 = arith.constant 0 : i32
    %c0_i32_0 = arith.constant 0 : i32
    %c0_i32_1 = arith.constant 0 : i32
    return %c0_i32, %c0_i32_0 : i32, i32
  }
  func.func @transform_6(%arg0: i32) -> (i32, i32) {
    %c0_i32 = arith.constant 0 : i32
    %c0_i32_0 = arith.constant 0 : i32
    %c0_i32_1 = arith.constant 0 : i32
    return %c0_i32, %c0_i32_0 : i32, i32
  }
  func.func @transform_7(%arg0: i32) -> (i32, i32) {
    %c0_i32 = arith.constant 0 : i32
    %c0_i32_0 = arith.constant 0 : i32
    %c0_i32_1 = arith.constant 0 : i32
    return %c0_i32, %c0_i32_0 : i32, i32
  }
  func.func @transform_8(%arg0: i32) -> (i32, i32, i32) {
    %c0_i32 = arith.constant 0 : i32
    %c0_i32_0 = arith.constant 0 : i32
    %c0_i32_1 = arith.constant 0 : i32
    return %arg0, %c0_i32, %c0_i32_0 : i32, i32, i32
  }
}

</mosaic_0001>

<llo_original>
// kernel: bottleneck_forward.1
$region0: #{bottleneck_forward.1}
  #allocation0 [shape = 'u32[]', space=smem, size = 0x4, offset = 0x4, fixed_abs, tag = 'smem constant byte address 0x4 - core index']
  #allocation1 [shape = 'u32[144,128]{1,0:T(1,128)}', space=vmem, size = 0x12000, scoped, tag = 'internal scratch']
  %s0 = inlined_call_operand.vmem [shape: f32[2,16,256], index: 0, kind: input, shape index: {}]
  %s1 = inlined_call_operand.vmem [shape: f32[4,16], index: 1, kind: input, shape index: {}]
  %s2 = inlined_call_operand.vmem [shape: f32[4,1], index: 2, kind: input, shape index: {}]
  %s3 = inlined_call_operand.vmem [shape: f32[4,36], index: 3, kind: input, shape index: {}]
  %s4 = inlined_call_operand.vmem [shape: f32[9,1,256], index: 4, kind: input, shape index: {}]
  %s5 = inlined_call_operand.vmem [shape: f32[4,1], index: 5, kind: input, shape index: {}]
  %s6 = inlined_call_operand.vmem [shape: f32[16,4], index: 6, kind: input, shape index: {}]
  %s7 = inlined_call_operand.vmem [shape: f32[16,1], index: 7, kind: input, shape index: {}]
  %s8 = inlined_call_operand.vmem [shape: f32[2,16,256], index: 8, kind: output, shape index: {}]
  %s9 = sld [smem:[#allocation0]]
  $region65: #{bottleneck_forward.1} parent=0
    _
  %s11 = ssub.s32 1, %s9
  %s12 = scalar_select 0, %s11, %s9
  loop: start=0, step=1, limit=4
  $region2: #{bottleneck_forward.1} parent=0 // loop_pre_header
    _
  $region3: #{bottleneck_forward.1} parent=0 // loop_header
    %s14 = sphi 0, %s18
    %p15 = scmp.ge.s32.totalorder %s14, 4
    %s24 = sphi 0, %s26
    %s27 = sphi 0, %s24
    %s28 = sphi 0, %s27
    %s44 = sphi 0, %s28
    %s48 = sphi 0, %s48
    %s50 = sphi 0, %s48
    %s51 = sphi 0, %s50
    %s65 = sphi 0, %s51
    %s69 = sphi 0, %s69
    %s71 = sphi 0, %s69
    %s72 = sphi 0, %s71
    %s86 = sphi 0, %s72
    %s90 = sphi 0, %s90
    %s92 = sphi 0, %s90
    %s93 = sphi 0, %s92
    %s107 = sphi 0, %s93
    %s111 = sphi 0, %s111
    %s113 = sphi 0, %s111
    %s114 = sphi 0, %s113
    %s128 = sphi 0, %s114
    %s132 = sphi 0, %s132
    %s134 = sphi 0, %s132
    %s135 = sphi 0, %s134
    %s149 = sphi 0, %s135
    %s153 = sphi 0, %s153
    %s155 = sphi 0, %s153
    %s156 = sphi 0, %s155
    %s170 = sphi 0, %s156
    %s174 = sphi 0, %s174
    %s176 = sphi 0, %s174
    %s177 = sphi 0, %s176
    %s191 = sphi 0, %s177
    %s197 = sphi 0, %s199
    %s200 = sphi 0, %s197
    %s201 = sphi 0, %s200
    %s217 = sphi 0, %s201
  $region4: #{bottleneck_forward.1} parent=0 // loop_header_branch
    %17 = sbr.rel (%p15) target = $region8
  $region5: #{bottleneck_forward.1} parent=0 // loop_body
    %s19 = ssub.s32 %s14, 1
    %s20 = ssub.s32 %s14, 2
    %s21 = sadd.s32 %s14, 1
    %s22 = ssub.s32 %s14, %s21
    %p23 = scmp.eq.s32.totalorder %s22, 0
    %s25 = sadd.s32 %s24, 1
    %s26 = scalar_select %p23, %s24, %s25
    %p29 = pneg %p23
    %p30 = scmp.eq.s32.totalorder %s14, 1
    %p31 = por %p29, %p30
    %p32 = scmp.ne.s32.totalorder %s24, %s27
    %p33 = scmp.eq.s32.totalorder %s14, 0
    %p34 = por %p32, %p33
    %p35 = scmp.ne.s32.totalorder %s24, %s27
    %p36 = scmp.eq.s32.totalorder %s19, 1
    %p37 = por %p35, %p36
    %p38 = scmp.ne.s32.totalorder %s27, %s28
    %p39 = scmp.eq.s32.totalorder %s19, 0
    %p40 = por %p38, %p39
    %p41 = scmp.ne.s32.totalorder %s27, %s28
    %p42 = scmp.eq.s32.totalorder %s20, 1
    %p43 = por %p41, %p42
    %p45 = scmp.ne.s32.totalorder %s28, %s44
    %p46 = scmp.eq.s32.totalorder %s20, 0
    %p47 = por %p45, %p46
    %s49 = sadd.s32 %s48, 1
    %p52 = scmp.eq.s32.totalorder %s14, 1
    %p53 = scmp.ne.s32.totalorder %s48, %s50
    %p54 = scmp.eq.s32.totalorder %s14, 0
    %p55 = por %p53, %p54
    %p56 = scmp.ne.s32.totalorder %s48, %s50
    %p57 = scmp.eq.s32.totalorder %s19, 1
    %p58 = por %p56, %p57
    %p59 = scmp.ne.s32.totalorder %s50, %s51
    %p60 = scmp.eq.s32.totalorder %s19, 0
    %p61 = por %p59, %p60
    %p62 = scmp.ne.s32.totalorder %s50, %s51
    %p63 = scmp.eq.s32.totalorder %s20, 1
    %p64 = por %p62, %p63
    %p66 = scmp.ne.s32.totalorder %s51, %s65
    %p67 = scmp.eq.s32.totalorder %s20, 0
    %p68 = por %p66, %p67
    %s70 = sadd.s32 %s69, 1
    %p73 = scmp.eq.s32.totalorder %s14, 1
    %p74 = scmp.ne.s32.totalorder %s69, %s71
    %p75 = scmp.eq.s32.totalorder %s14, 0
    %p76 = por %p74, %p75
    %p77 = scmp.ne.s32.totalorder %s69, %s71
    %p78 = scmp.eq.s32.totalorder %s19, 1
    %p79 = por %p77, %p78
    %p80 = scmp.ne.s32.totalorder %s71, %s72
    %p81 = scmp.eq.s32.totalorder %s19, 0
    %p82 = por %p80, %p81
    %p83 = scmp.ne.s32.totalorder %s71, %s72
    %p84 = scmp.eq.s32.totalorder %s20, 1
    %p85 = por %p83, %p84
    %p87 = scmp.ne.s32.totalorder %s72, %s86
    %p88 = scmp.eq.s32.totalorder %s20, 0
    %p89 = por %p87, %p88
    %s91 = sadd.s32 %s90, 1
    %p94 = scmp.eq.s32.totalorder %s14, 1
    %p95 = scmp.ne.s32.totalorder %s90, %s92
    %p96 = scmp.eq.s32.totalorder %s14, 0
    %p97 = por %p95, %p96
    %p98 = scmp.ne.s32.totalorder %s90, %s92
    %p99 = scmp.eq.s32.totalorder %s19, 1
    %p100 = por %p98, %p99
    %p101 = scmp.ne.s32.totalorder %s92, %s93
    %p102 = scmp.eq.s32.totalorder %s19, 0
    %p103 = por %p101, %p102
    %p104 = scmp.ne.s32.totalorder %s92, %s93
    %p105 = scmp.eq.s32.totalorder %s20, 1
    %p106 = por %p104, %p105
    %p108 = scmp.ne.s32.totalorder %s93, %s107
    %p109 = scmp.eq.s32.totalorder %s20, 0
    %p110 = por %p108, %p109
    %s112 = sadd.s32 %s111, 1
    %p115 = scmp.eq.s32.totalorder %s14, 1
    %p116 = scmp.ne.s32.totalorder %s111, %s113
    %p117 = scmp.eq.s32.totalorder %s14, 0
    %p118 = por %p116, %p117
    %p119 = scmp.ne.s32.totalorder %s111, %s113
    %p120 = scmp.eq.s32.totalorder %s19, 1
    %p121 = por %p119, %p120
    %p122 = scmp.ne.s32.totalorder %s113, %s114
    %p123 = scmp.eq.s32.totalorder %s19, 0
    %p124 = por %p122, %p123
    %p125 = scmp.ne.s32.totalorder %s113, %s114
    %p126 = scmp.eq.s32.totalorder %s20, 1
    %p127 = por %p125, %p126
    %p129 = scmp.ne.s32.totalorder %s114, %s128
    %p130 = scmp.eq.s32.totalorder %s20, 0
    %p131 = por %p129, %p130
    %s133 = sadd.s32 %s132, 1
    %p136 = scmp.eq.s32.totalorder %s14, 1
    %p137 = scmp.ne.s32.totalorder %s132, %s134
    %p138 = scmp.eq.s32.totalorder %s14, 0
    %p139 = por %p137, %p138
    %p140 = scmp.ne.s32.totalorder %s132, %s134
    %p141 = scmp.eq.s32.totalorder %s19, 1
    %p142 = por %p140, %p141
    %p143 = scmp.ne.s32.totalorder %s134, %s135
    %p144 = scmp.eq.s32.totalorder %s19, 0
    %p145 = por %p143, %p144
    %p146 = scmp.ne.s32.totalorder %s134, %s135
    %p147 = scmp.eq.s32.totalorder %s20, 1
    %p148 = por %p146, %p147
    %p150 = scmp.ne.s32.totalorder %s135, %s149
    %p151 = scmp.eq.s32.totalorder %s20, 0
    %p152 = por %p150, %p151
    %s154 = sadd.s32 %s153, 1
    %p157 = scmp.eq.s32.totalorder %s14, 1
    %p158 = scmp.ne.s32.totalorder %s153, %s155
    %p159 = scmp.eq.s32.totalorder %s14, 0
    %p160 = por %p158, %p159
    %p161 = scmp.ne.s32.totalorder %s153, %s155
    %p162 = scmp.eq.s32.totalorder %s19, 1
    %p163 = por %p161, %p162
    %p164 = scmp.ne.s32.totalorder %s155, %s156
    %p165 = scmp.eq.s32.totalorder %s19, 0
    %p166 = por %p164, %p165
    %p167 = scmp.ne.s32.totalorder %s155, %s156
    %p168 = scmp.eq.s32.totalorder %s20, 1
    %p169 = por %p167, %p168
    %p171 = scmp.ne.s32.totalorder %s156, %s170
    %p172 = scmp.eq.s32.totalorder %s20, 0
    %p173 = por %p171, %p172
    %s175 = sadd.s32 %s174, 1
    %p178 = scmp.eq.s32.totalorder %s14, 1
    %p179 = scmp.ne.s32.totalorder %s174, %s176
    %p180 = scmp.eq.s32.totalorder %s14, 0
    %p181 = por %p179, %p180
    %p182 = scmp.ne.s32.totalorder %s174, %s176
    %p183 = scmp.eq.s32.totalorder %s19, 1
    %p184 = por %p182, %p183
    %p185 = scmp.ne.s32.totalorder %s176, %s177
    %p186 = scmp.eq.s32.totalorder %s19, 0
    %p187 = por %p185, %p186
    %p188 = scmp.ne.s32.totalorder %s176, %s177
    %p189 = scmp.eq.s32.totalorder %s20, 1
    %p190 = por %p188, %p189
    %p192 = scmp.ne.s32.totalorder %s177, %s191
    %p193 = scmp.eq.s32.totalorder %s20, 0
    %p194 = por %p192, %p193
    %s195 = ssub.s32 %s14, %s21
    %p196 = scmp.eq.s32.totalorder %s195, 0
    %s198 = sadd.s32 %s197, 1
    %s199 = scalar_select %p196, %s197, %s198
    %p202 = pneg %p196
    %p203 = scmp.eq.s32.totalorder %s14, 1
    %p204 = por %p202, %p203
    %p205 = scmp.ne.s32.totalorder %s197, %s200
    %p206 = scmp.eq.s32.totalorder %s14, 0
    %p207 = por %p205, %p206
    %p208 = scmp.ne.s32.totalorder %s197, %s200
    %p209 = scmp.eq.s32.totalorder %s19, 1
    %p210 = por %p208, %p209
    %p211 = scmp.ne.s32.totalorder %s200, %s201
    %p212 = scmp.eq.s32.totalorder %s19, 0
    %p213 = por %p211, %p212
    %p214 = scmp.ne.s32.totalorder %s200, %s201
    %p215 = scmp.eq.s32.totalorder %s20, 1
    %p216 = por %p214, %p215
    %p218 = scmp.ne.s32.totalorder %s201, %s217
    %p219 = scmp.eq.s32.totalorder %s20, 0
    %p220 = por %p218, %p219
    %p221 = scmp.le.s32.totalorder 1, %s14
    %p222 = scmp.lt.s32.totalorder %s14, 3
    %p223 = pnand %p221, %p222
    %p224 = pneg %p223
    // Predicated region
    $region9: #{bottleneck_forward.1} parent=5 // pred_check
      _
    $region10: #{bottleneck_forward.1} parent=5 // pred_check_branch
      %226 = sbr.rel (%p223) target = $region12
    $region11: #{bottleneck_forward.1} parent=5 // pred_region
      %s227 = ssub.s32 %s14, 1
      // Predicated region
      $region13: #{bottleneck_forward.1} parent=11 // pred_check
        %p228 = pneg %p61
      $region14: #{bottleneck_forward.1} parent=11 // pred_check_branch
        %230 = sbr.rel (%p228) target = $region16
      $region15: #{bottleneck_forward.1} parent=11 // pred_region
        _
      $region16: #{bottleneck_forward.1} parent=11 // pred_fallthru
        _
      // Predicated region
      $region17: #{bottleneck_forward.1} parent=11 // pred_check
        %p231 = pneg %p82
      $region18: #{bottleneck_forward.1} parent=11 // pred_check_branch
        %233 = sbr.rel (%p231) target = $region20
      $region19: #{bottleneck_forward.1} parent=11 // pred_region
        _
      $region20: #{bottleneck_forward.1} parent=11 // pred_fallthru
        _
      // Predicated region
      $region21: #{bottleneck_forward.1} parent=11 // pred_check
        %p234 = pneg %p103
      $region22: #{bottleneck_forward.1} parent=11 // pred_check_branch
        %236 = sbr.rel (%p234) target = $region24
      $region23: #{bottleneck_forward.1} parent=11 // pred_region
        _
      $region24: #{bottleneck_forward.1} parent=11 // pred_fallthru
        _
      // Predicated region
      $region25: #{bottleneck_forward.1} parent=11 // pred_check
        %p237 = pneg %p124
      $region26: #{bottleneck_forward.1} parent=11 // pred_check_branch
        %239 = sbr.rel (%p237) target = $region28
      $region27: #{bottleneck_forward.1} parent=11 // pred_region
        _
      $region28: #{bottleneck_forward.1} parent=11 // pred_fallthru
        _
      // Predicated region
      $region29: #{bottleneck_forward.1} parent=11 // pred_check
        %p240 = pneg %p145
      $region30: #{bottleneck_forward.1} parent=11 // pred_check_branch
        %242 = sbr.rel (%p240) target = $region32
      $region31: #{bottleneck_forward.1} parent=11 // pred_region
        _
      $region32: #{bottleneck_forward.1} parent=11 // pred_fallthru
        _
      // Predicated region
      $region33: #{bottleneck_forward.1} parent=11 // pred_check
        %p243 = pneg %p166
      $region34: #{bottleneck_forward.1} parent=11 // pred_check_branch
        %245 = sbr.rel (%p243) target = $region36
      $region35: #{bottleneck_forward.1} parent=11 // pred_region
        _
      $region36: #{bottleneck_forward.1} parent=11 // pred_fallthru
        _
      // Predicated region
      $region37: #{bottleneck_forward.1} parent=11 // pred_check
        %p246 = pneg %p187
      $region38: #{bottleneck_forward.1} parent=11 // pred_check_branch
        %248 = sbr.rel (%p246) target = $region40
      $region39: #{bottleneck_forward.1} parent=11 // pred_region
        _
      $region40: #{bottleneck_forward.1} parent=11 // pred_fallthru
        _
    $region12: #{bottleneck_forward.1} parent=5 // pred_fallthru
      _
    %p249 = scmp.lt.s32.totalorder %s14, 2
    // Predicated region
    $region41: #{bottleneck_forward.1} parent=5 // pred_check
      %p250 = pneg %p249
    $region42: #{bottleneck_forward.1} parent=5 // pred_check_branch
      %252 = sbr.rel (%p250) target = $region44
    $region43: #{bottleneck_forward.1} parent=5 // pred_region
      // Predicated region
      $region45: #{bottleneck_forward.1} parent=43 // pred_check
        %p253 = pneg %p34
      $region46: #{bottleneck_forward.1} parent=43 // pred_check_branch
        %255 = sbr.rel (%p253) target = $region48
      $region47: #{bottleneck_forward.1} parent=43 // pred_region
        %p256 = scmp.lt.s32.totalorder %s14, 1
        %s257 = scalar_select %p256, %s14, 1
        %s258 = smul.addr %s257, 4
        %s259 = smul.addr %s258, 8
        %s260 = scalar_lea.vmem %s0, %s259
      $region48: #{bottleneck_forward.1} parent=43 // pred_fallthru
        _
    $region44: #{bottleneck_forward.1} parent=5 // pred_fallthru
      _
    %p261 = scmp.le.s32.totalorder 1, %s14
    %p262 = scmp.lt.s32.totalorder %s14, 3
    %p263 = pnand %p261, %p262
    %p264 = pneg %p263
    // Predicated region
    $region49: #{bottleneck_forward.1} parent=5 // pred_check
      _
    $region50: #{bottleneck_forward.1} parent=5 // pred_check_branch
      %266 = sbr.rel (%p263) target = $region52
    $region51: #{bottleneck_forward.1} parent=5 // pred_region
      %s267 = ssub.s32 %s14, 1
      %p268 = scmp.lt.s32.totalorder %s19, 1
      %s269 = scalar_select %p268, %s19, 1
      %s270 = smul.addr %s269, 4
      %s271 = smul.addr %s270, 8
      %s272 = scalar_lea.vmem %s0, %s271
      %p273 = pneg %p40
      %p274 = pneg %p37
      %p275 = pneg %p61
      %p276 = pneg %p58
      %p277 = pneg %p82
      %p278 = pneg %p79
      %p279 = pneg %p103
      %p280 = pneg %p100
      %p281 = pneg %p124
      %p282 = pneg %p121
      %p283 = pneg %p145
      %p284 = pneg %p142
      %p285 = pneg %p166
      %p286 = pneg %p163
      %p287 = pneg %p187
      %p288 = pneg %p184
      %p289 = pneg %p213
      %p290 = pneg %p210
      %p291 = scmp.lt.s32.totalorder %s19, 1
      %s292 = scalar_select %p291, %s19, 1
      %s293 = smul.addr %s292, 4
      %s294 = smul.addr %s293, 8
      %s295 = scalar_lea.vmem %s8, %s294
      %p296 = scmp.lt.s32.totalorder %s19, 1
      %s297 = scalar_select %p296, %s19, 1
      %s298 = smul.addr %s297, 4
      %s299 = smul.addr %s298, 8
      %s300 = scalar_lea.vmem %s0, %s299
      %p301 = scmp.lt.s32.totalorder %s19, 1
      %s302 = scalar_select %p301, %s19, 1
      %s303 = smul.addr %s302, 4
      %s304 = smul.addr %s303, 8
      %s305 = scalar_lea.vmem %s8, %s304
      %v306 = vld [vmem:[%s1] sm:$0xf]
      %v307 = vld [vmem:[%s3] sm:$0xf]
      %v308 = vld [vmem:[%s6] sm:$0xff]
      %v309 = vld [vmem:[%s6 + $0x8] sm:$0xff]
      %v310 = vld [vmem:[%s2] sm:$0xf]
      %v311 = vld [vmem:[%s5] sm:$0xf]
      %v312 = vld [vmem:[%s7] sm:$0xff]
      %v313 = vld [vmem:[%s7 + $0x8] sm:$0xff]
      %v314 = vld [vmem:[%s300] sm:$0xff]
      %v315 = vld [vmem:[%s300 + $0x8] sm:$0xff]
      %v316 = vld [vmem:[%s300 + $0x10] sm:$0xff]
      %v317 = vld [vmem:[%s300 + $0x18] sm:$0xff]
      %319 = vset.pattern.permute.xlu0 0
      %320 = vperm.xlu0 %319, %v310
      %v321 = vpop.permute.xlu0 %320
      %vm323 = vcmask 130048
      %v325 = vsel %vm323, %v306, 0
      %327 = vmatprep.subr.mxu0 %v315
      %328 = vmatpush1.msra.mxu0 %v314
      %329 = vmatprep.subr.mxu0 %v317
      %330 = vmatpush1.msra.mxu0 %v316
      %331 = vmatprep.subr.mxu0 0.0
      %332 = vmatpush1.msra.mxu0 0.0
      %333 = vmatprep.subr.mxu0 0.0
      %334 = vmatpush1.msra.mxu0 0.0
      %335 = vmatprep.subr.mxu0 0.0
      %336 = vmatpush1.msra.mxu0 0.0
      %337 = vmatprep.subr.mxu0 0.0
      %338 = vmatpush1.msra.mxu0 0.0
      %339 = vmatprep.subr.mxu0 0.0
      %340 = vmatpush1.msra.mxu0 0.0
      %341 = vmatprep.subr.mxu0 0.0
      %342 = vmatpush1.msra.mxu0 0.0
      %343 = vmatprep.subr.mxu0 0.0
      %344 = vmatpush1.msra.mxu0 0.0
      %345 = vmatprep.subr.mxu0 0.0
      %346 = vmatpush1.msra.mxu0 0.0
      %347 = vmatprep.subr.mxu0 0.0
      %348 = vmatpush1.msra.mxu0 0.0
      %349 = vmatprep.subr.mxu0 0.0
      %350 = vmatpush1.msra.mxu0 0.0
      %351 = vmatprep.subr.mxu0 0.0
      %352 = vmatpush1.msra.mxu0 0.0
      %353 = vmatprep.subr.mxu0 0.0
      %354 = vmatpush1.msra.mxu0 0.0
      %355 = vmatprep.subr.mxu0 0.0
      %356 = vmatpush1.msra.mxu0 0.0
      %357 = vmatprep.subr.mxu0 0.0
      %358 = vmatpush1.msra.mxu0 0.0
      %359 = vmatprep.subr.mxu0 0.0
      %360 = vmatpush1.msra.mxu0 0.0
      %361 = vmatprep.subr.mxu0 0.0
      %362 = vmatpush1.msra.mxu0 0.0
      %363 = vmatprep.subr.mxu0 0.0
      %364 = vmatpush1.msra.mxu0 0.0
      %365 = vmatprep.subr.mxu0 0.0
      %366 = vmatpush1.msra.mxu0 0.0
      %367 = vmatprep.subr.mxu0 0.0
      %368 = vmatpush1.msra.mxu0 0.0
      %369 = vmatprep.subr.mxu0 0.0
      %370 = vmatpush1.msra.mxu0 0.0
      %371 = vmatprep.subr.mxu0 0.0
      %372 = vmatpush1.msra.mxu0 0.0
      %373 = vmatprep.subr.mxu0 0.0
      %374 = vmatpush1.msra.mxu0 0.0
      %375 = vmatprep.subr.mxu0 0.0
      %376 = vmatpush1.msra.mxu0 0.0
      %377 = vmatprep.subr.mxu0 0.0
      %378 = vmatpush1.msra.mxu0 0.0
      %379 = vmatprep.subr.mxu0 0.0
      %380 = vmatpush1.msra.mxu0 0.0
      %381 = vmatprep.subr.mxu0 0.0
      %382 = vmatpush1.msra.mxu0 0.0
      %383 = vmatprep.subr.mxu0 0.0
      %384 = vmatpush1.msra.mxu0 0.0
      %385 = vmatprep.subr.mxu0 0.0
      %386 = vmatpush1.msra.mxu0 0.0
      %387 = vmatprep.subr.mxu0 0.0
      %388 = vmatpush1.msra.mxu0 0.0
      %389 = vmatprep.subr.mxu0 0.0
      %390 = vmatpush1.msra.mxu0 0.0
      %391 = vmatprep.mubr.f32.mxu0 0.0
      %392 = vmatmul.mubr.f32.gmra.mrb[0].mxu0 %v325
      %v393 = vpop.f32.mrb[0].mxu0
      %v394 = vadd.f32 %v321, %v393
      %v395 = vpop.f32.mrb[0].mxu0
      %v396 = vadd.f32 %v321, %v395
      %397 = vdwg.mxu0
      %v398 = vmax.f32 %v394, 0.0
      %v399 = vmax.f32 %v396, 0.0
      %400 = vrot.lane.b32.xlu0 %v398, 17
      %v401 = vpop.permute.xlu0 %400
      %402 = vrot.lane.b32.xlu0 %v399, 17
      %v403 = vpop.permute.xlu0 %402
      %v404 = vlaneseq
      %v405 = vand.u32 %v404, 127
      %vm406 = vcmp.lt.s32.totalorder %v405, 17
      %v407 = vsel %vm406, %v401, %v403
      %v408 = vsel %vm406, %v403, %v401
      %v409 = vld [vmem:[%s4] sm:$0x3]
      %v411 = vlaneseq
      %v412 = vshrl.u32 %v411, 7
      %v413 = vsub.s32 0, %v412
      %v414 = vrot.slane %v409, %v413
      %v415 = vlaneseq
      %v416 = vshrl.u32 %v415, 7
      %v417 = vsub.s32 1, %v416
      %v418 = vrot.slane %v409, %v417
      %v421 = vmul.f32 %v408, %v414
      %v422 = vmul.f32 %v407, %v418
      %423 = vrot.lane.b32.xlu0 %v398, 16
      %v424 = vpop.permute.xlu0 %423
      %425 = vrot.lane.b32.xlu0 %v399, 16
      %v426 = vpop.permute.xlu0 %425
      %vm427 = vcmp.lt.s32.totalorder %v405, 16
      %v428 = vsel %vm427, %v424, %v426
      %v429 = vsel %vm427, %v426, %v424
      %s430 = scalar_lea.vmem %s4, 2
      %v431 = vld [vmem:[%s430] sm:$0x3]
      %v433 = vlaneseq
      %v434 = vshrl.u32 %v433, 7
      %v435 = vsub.s32 0, %v434
      %v436 = vrot.slane %v431, %v435
      %v437 = vlaneseq
      %v438 = vshrl.u32 %v437, 7
      %v439 = vsub.s32 1, %v438
      %v440 = vrot.slane %v431, %v439
      %v443 = vmul.f32 %v429, %v436
      %v444 = vmul.f32 %v428, %v440
      %445 = vrot.lane.b32.xlu0 %v398, 15
      %v446 = vpop.permute.xlu0 %445
      %447 = vrot.lane.b32.xlu0 %v399, 15
      %v448 = vpop.permute.xlu0 %447
      %vm449 = vcmp.lt.s32.totalorder %v405, 15
      %v450 = vsel %vm449, %v446, %v448
      %v451 = vsel %vm449, %v448, %v446
      %s452 = scalar_lea.vmem %s4, 4
      %v453 = vld [vmem:[%s452] sm:$0x3]
      %v455 = vlaneseq
      %v456 = vshrl.u32 %v455, 7
      %v457 = vsub.s32 0, %v456
      %v458 = vrot.slane %v453, %v457
      %v459 = vlaneseq
      %v460 = vshrl.u32 %v459, 7
      %v461 = vsub.s32 1, %v460
      %v462 = vrot.slane %v453, %v461
      %v465 = vmul.f32 %v451, %v458
      %v466 = vmul.f32 %v450, %v462
      %467 = vrot.lane.b32.xlu0 %v398, 1
      %v468 = vpop.permute.xlu0 %467
      %469 = vrot.lane.b32.xlu0 %v399, 1
      %v470 = vpop.permute.xlu0 %469
      %vm471 = vcmp.lt.s32.totalorder %v405, 1
      %v472 = vsel %vm471, %v468, %v470
      %v473 = vsel %vm471, %v470, %v468
      %s474 = scalar_lea.vmem %s4, 6
      %v475 = vld [vmem:[%s474] sm:$0x3]
      %v477 = vlaneseq
      %v478 = vshrl.u32 %v477, 7
      %v479 = vsub.s32 0, %v478
      %v480 = vrot.slane %v475, %v479
      %v481 = vlaneseq
      %v482 = vshrl.u32 %v481, 7
      %v483 = vsub.s32 1, %v482
      %v484 = vrot.slane %v475, %v483
      %v487 = vmul.f32 %v473, %v480
      %v488 = vmul.f32 %v472, %v484
      %489 = vrot.lane.b32.xlu0 %v398, 127
      %v490 = vpop.permute.xlu0 %489
      %491 = vrot.lane.b32.xlu0 %v399, 127
      %v492 = vpop.permute.xlu0 %491
      %vm493 = vcmp.lt.s32.totalorder %v405, 127
      %v494 = vsel %vm493, %v490, %v492
      %v495 = vsel %vm493, %v492, %v490
      %s496 = scalar_lea.vmem %s4, 10
      %v497 = vld [vmem:[%s496] sm:$0x3]
      %v499 = vlaneseq
      %v500 = vshrl.u32 %v499, 7
      %v501 = vsub.s32 0, %v500
      %v502 = vrot.slane %v497, %v501
      %v503 = vlaneseq
      %v504 = vshrl.u32 %v503, 7
      %v505 = vsub.s32 1, %v504
      %v506 = vrot.slane %v497, %v505
      %v509 = vmul.f32 %v494, %v502
      %v510 = vmul.f32 %v495, %v506
      %511 = vrot.lane.b32.xlu0 %v398, 113
      %v512 = vpop.permute.xlu0 %511
      %513 = vrot.lane.b32.xlu0 %v399, 113
      %v514 = vpop.permute.xlu0 %513
      %vm515 = vcmp.lt.s32.totalorder %v405, 113
      %v516 = vsel %vm515, %v512, %v514
      %v517 = vsel %vm515, %v514, %v512
      %s518 = scalar_lea.vmem %s4, 12
      %v519 = vld [vmem:[%s518] sm:$0x3]
      %v521 = vlaneseq
      %v522 = vshrl.u32 %v521, 7
      %v523 = vsub.s32 0, %v522
      %v524 = vrot.slane %v519, %v523
      %v525 = vlaneseq
      %v526 = vshrl.u32 %v525, 7
      %v527 = vsub.s32 1, %v526
      %v528 = vrot.slane %v519, %v527
      %v531 = vmul.f32 %v516, %v524
      %v532 = vmul.f32 %v517, %v528
      %533 = vrot.lane.b32.xlu0 %v398, 112
      %v534 = vpop.permute.xlu0 %533
      %535 = vrot.lane.b32.xlu0 %v399, 112
      %v536 = vpop.permute.xlu0 %535
      %vm537 = vcmp.lt.s32.totalorder %v405, 112
      %v538 = vsel %vm537, %v534, %v536
      %v539 = vsel %vm537, %v536, %v534
      %s540 = scalar_lea.vmem %s4, 14
      %v541 = vld [vmem:[%s540] sm:$0x3]
      %v543 = vlaneseq
      %v544 = vshrl.u32 %v543, 7
      %v545 = vsub.s32 0, %v544
      %v546 = vrot.slane %v541, %v545
      %v547 = vlaneseq
      %v548 = vshrl.u32 %v547, 7
      %v549 = vsub.s32 1, %v548
      %v550 = vrot.slane %v541, %v549
      %v553 = vmul.f32 %v538, %v546
      %v554 = vmul.f32 %v539, %v550
      %555 = vrot.lane.b32.xlu0 %v398, 111
      %v556 = vpop.permute.xlu0 %555
      %557 = vrot.lane.b32.xlu0 %v399, 111
      %v558 = vpop.permute.xlu0 %557
      %vm559 = vcmp.lt.s32.totalorder %v405, 111
      %v560 = vsel %vm559, %v556, %v558
      %v561 = vsel %vm559, %v558, %v556
      %s562 = scalar_lea.vmem %s4, 16
      %v563 = vld [vmem:[%s562] sm:$0x3]
      %v565 = vlaneseq
      %v566 = vshrl.u32 %v565, 7
      %v567 = vsub.s32 0, %v566
      %v568 = vrot.slane %v563, %v567
      %v569 = vlaneseq
      %v570 = vshrl.u32 %v569, 7
      %v571 = vsub.s32 1, %v570
      %v572 = vrot.slane %v563, %v571
      %v575 = vmul.f32 %v560, %v568
      %v576 = vmul.f32 %v561, %v572
      %v579 = vrot.slane %v443, 4
      %v580 = vrot.slane %v444, 4
      %v585 = vrot.slane %v487, 4
      %v586 = vrot.slane %v488, 4
      %v591 = vrot.slane %v509, 4
      %v592 = vrot.slane %v510, 4
      %v597 = vrot.slane %v553, 4
      %v598 = vrot.slane %v554, 4
      %vm601 = vcmask 1043456
      %v602 = vsel %vm601, %v421, %v579
      %v603 = vsel %vm601, %v422, %v580
      %v604 = vsel %vm601, %v465, %v585
      %v605 = vsel %vm601, %v466, %v586
      %v606 = vsel %vm601, %v398, %v591
      %v607 = vsel %vm601, %v399, %v592
      %v608 = vsel %vm601, %v531, %v597
      %v609 = vsel %vm601, %v532, %v598
      %611 = vset.pattern.permute.xlu0 0
      %612 = vperm.xlu0 %611, %v311
      %v613 = vpop.permute.xlu0 %612
      %vm615 = vcmask 293888
      %v617 = vsel %vm615, %v307, 0
      %v620 = vsel %vm601, %v575, 0
      %v623 = vsel %vm601, %v576, 0
      %625 = vmatprep.subr.mxu0 %v603
      %626 = vmatpush1.msra.mxu0 %v602
      %627 = vmatprep.subr.mxu0 %v605
      %628 = vmatpush1.msra.mxu0 %v604
      %629 = vmatprep.subr.mxu0 %v607
      %630 = vmatpush1.msra.mxu0 %v606
      %631 = vmatprep.subr.mxu0 %v609
      %632 = vmatpush1.msra.mxu0 %v608
      %633 = vmatprep.subr.mxu0 %v623
      %634 = vmatpush1.msra.mxu0 %v620
      %635 = vmatprep.subr.mxu0 0.0
      %636 = vmatpush1.msra.mxu0 0.0
      %637 = vmatprep.subr.mxu0 0.0
      %638 = vmatpush1.msra.mxu0 0.0
      %639 = vmatprep.subr.mxu0 0.0
      %640 = vmatpush1.msra.mxu0 0.0
      %641 = vmatprep.subr.mxu0 0.0
      %642 = vmatpush1.msra.mxu0 0.0
      %643 = vmatprep.subr.mxu0 0.0
      %644 = vmatpush1.msra.mxu0 0.0
      %645 = vmatprep.subr.mxu0 0.0
      %646 = vmatpush1.msra.mxu0 0.0
      %647 = vmatprep.subr.mxu0 0.0
      %648 = vmatpush1.msra.mxu0 0.0
      %649 = vmatprep.subr.mxu0 0.0
      %650 = vmatpush1.msra.mxu0 0.0
      %651 = vmatprep.subr.mxu0 0.0
      %652 = vmatpush1.msra.mxu0 0.0
      %653 = vmatprep.subr.mxu0 0.0
      %654 = vmatpush1.msra.mxu0 0.0
      %655 = vmatprep.subr.mxu0 0.0
      %656 = vmatpush1.msra.mxu0 0.0
      %657 = vmatprep.subr.mxu0 0.0
      %658 = vmatpush1.msra.mxu0 0.0
      %659 = vmatprep.subr.mxu0 0.0
      %660 = vmatpush1.msra.mxu0 0.0
      %661 = vmatprep.subr.mxu0 0.0
      %662 = vmatpush1.msra.mxu0 0.0
      %663 = vmatprep.subr.mxu0 0.0
      %664 = vmatpush1.msra.mxu0 0.0
      %665 = vmatprep.subr.mxu0 0.0
      %666 = vmatpush1.msra.mxu0 0.0
      %667 = vmatprep.subr.mxu0 0.0
      %668 = vmatpush1.msra.mxu0 0.0
      %669 = vmatprep.subr.mxu0 0.0
      %670 = vmatpush1.msra.mxu0 0.0
      %671 = vmatprep.subr.mxu0 0.0
      %672 = vmatpush1.msra.mxu0 0.0
      %673 = vmatprep.subr.mxu0 0.0
      %674 = vmatpush1.msra.mxu0 0.0
      %675 = vmatprep.subr.mxu0 0.0
      %676 = vmatpush1.msra.mxu0 0.0
      %677 = vmatprep.subr.mxu0 0.0
      %678 = vmatpush1.msra.mxu0 0.0
      %679 = vmatprep.subr.mxu0 0.0
      %680 = vmatpush1.msra.mxu0 0.0
      %681 = vmatprep.subr.mxu0 0.0
      %682 = vmatpush1.msra.mxu0 0.0
      %683 = vmatprep.subr.mxu0 0.0
      %684 = vmatpush1.msra.mxu0 0.0
      %685 = vmatprep.subr.mxu0 0.0
      %686 = vmatpush1.msra.mxu0 0.0
      %687 = vmatprep.subr.mxu0 0.0
      %688 = vmatpush1.msra.mxu0 0.0
      %689 = vmatprep.mubr.f32.mxu0 0.0
      %690 = vmatmul.mubr.f32.gmra.mrb[0].mxu0 %v617
      %v691 = vpop.f32.mrb[0].mxu0
      %v692 = vadd.f32 %v613, %v691
      %v693 = vpop.f32.mrb[0].mxu0
      %v694 = vadd.f32 %v613, %v693
      %695 = vdwg.mxu0
      %v696 = vmax.f32 %v692, 0.0
      %v697 = vmax.f32 %v694, 0.0
      %699 = vset.pattern.permute.xlu0 0
      %700 = vperm.xlu0 %699, %v312
      %v701 = vpop.permute.xlu0 %700
      %704 = vset.pattern.permute.xlu0 0
      %705 = vperm.xlu0 %704, %v313
      %v706 = vpop.permute.xlu0 %705
      %vm708 = vcmask 31744
      %v710 = vsel %vm708, %v308, 0
      %v713 = vsel %vm708, %v309, 0
      %v716 = vsel %vm601, %v696, 0
      %v719 = vsel %vm601, %v697, 0
      %721 = vmatprep.subr.mxu0 %v719
      %722 = vmatpush1.msra.mxu0 %v716
      %723 = vmatprep.subr.mxu0 0.0
      %724 = vmatpush1.msra.mxu0 0.0
      %725 = vmatprep.subr.mxu0 0.0
      %726 = vmatpush1.msra.mxu0 0.0
      %727 = vmatprep.subr.mxu0 0.0
      %728 = vmatpush1.msra.mxu0 0.0
      %729 = vmatprep.subr.mxu0 0.0
      %730 = vmatpush1.msra.mxu0 0.0
      %731 = vmatprep.subr.mxu0 0.0
      %732 = vmatpush1.msra.mxu0 0.0
      %733 = vmatprep.subr.mxu0 0.0
      %734 = vmatpush1.msra.mxu0 0.0
      %735 = vmatprep.subr.mxu0 0.0
      %736 = vmatpush1.msra.mxu0 0.0
      %737 = vmatprep.subr.mxu0 0.0
      %738 = vmatpush1.msra.mxu0 0.0
      %739 = vmatprep.subr.mxu0 0.0
      %740 = vmatpush1.msra.mxu0 0.0
      %741 = vmatprep.subr.mxu0 0.0
      %742 = vmatpush1.msra.mxu0 0.0
      %743 = vmatprep.subr.mxu0 0.0
      %744 = vmatpush1.msra.mxu0 0.0
      %745 = vmatprep.subr.mxu0 0.0
      %746 = vmatpush1.msra.mxu0 0.0
      %747 = vmatprep.subr.mxu0 0.0
      %748 = vmatpush1.msra.mxu0 0.0
      %749 = vmatprep.subr.mxu0 0.0
      %750 = vmatpush1.msra.mxu0 0.0
      %751 = vmatprep.subr.mxu0 0.0
      %752 = vmatpush1.msra.mxu0 0.0
      %753 = vmatprep.subr.mxu0 0.0
      %754 = vmatpush1.msra.mxu0 0.0
      %755 = vmatprep.subr.mxu0 0.0
      %756 = vmatpush1.msra.mxu0 0.0
      %757 = vmatprep.subr.mxu0 0.0
      %758 = vmatpush1.msra.mxu0 0.0
      %759 = vmatprep.subr.mxu0 0.0
      %760 = vmatpush1.msra.mxu0 0.0
      %761 = vmatprep.subr.mxu0 0.0
      %762 = vmatpush1.msra.mxu0 0.0
      %763 = vmatprep.subr.mxu0 0.0
      %764 = vmatpush1.msra.mxu0 0.0
      %765 = vmatprep.subr.mxu0 0.0
      %766 = vmatpush1.msra.mxu0 0.0
      %767 = vmatprep.subr.mxu0 0.0
      %768 = vmatpush1.msra.mxu0 0.0
      %769 = vmatprep.subr.mxu0 0.0
      %770 = vmatpush1.msra.mxu0 0.0
      %771 = vmatprep.subr.mxu0 0.0
      %772 = vmatpush1.msra.mxu0 0.0
      %773 = vmatprep.subr.mxu0 0.0
      %774 = vmatpush1.msra.mxu0 0.0
      %775 = vmatprep.subr.mxu0 0.0
      %776 = vmatpush1.msra.mxu0 0.0
      %777 = vmatprep.subr.mxu0 0.0
      %778 = vmatpush1.msra.mxu0 0.0
      %779 = vmatprep.subr.mxu0 0.0
      %780 = vmatpush1.msra.mxu0 0.0
      %781 = vmatprep.subr.mxu0 0.0
      %782 = vmatpush1.msra.mxu0 0.0
      %783 = vmatprep.subr.mxu0 0.0
      %784 = vmatpush1.msra.mxu0 0.0
      %785 = vmatprep.mubr.f32.mxu0 0.0
      %786 = vmatmul.mubr.f32.gmra.mrb[0].mxu0 %v710
      %v787 = vpop.f32.mrb[0].mxu0
      %v788 = vadd.f32 %v701, %v787
      %v789 = vpop.f32.mrb[0].mxu0
      %v790 = vadd.f32 %v701, %v789
      %791 = vmatprep.mubr.f32.mxu0 0.0
      %792 = vmatmul.mubr.f32.gmra.mrb[0].mxu0 %v713
      %v793 = vpop.f32.mrb[0].mxu0
      %v794 = vadd.f32 %v706, %v793
      %v795 = vpop.f32.mrb[0].mxu0
      %v796 = vadd.f32 %v706, %v795
      %797 = vdwg.mxu0
      %v798 = vadd.f32 %v788, %v314
      %v799 = vadd.f32 %v790, %v315
      %v800 = vadd.f32 %v794, %v316
      %v801 = vadd.f32 %v796, %v317
      %802 = vst [vmem:[%s305] sm:$0xff] %v798
      %803 = vst [vmem:[%s305 + $0x8] sm:$0xff] %v799
      %804 = vst [vmem:[%s305 + $0x10] sm:$0xff] %v800
      %805 = vst [vmem:[%s305 + $0x18] sm:$0xff] %v801
      %p806 = scmp.lt.s32.totalorder %s19, 1
      %s807 = scalar_select %p806, %s19, 1
      %s808 = smul.addr %s807, 4
      %s809 = smul.addr %s808, 8
      %s810 = scalar_lea.vmem %s8, %s809
      // Predicated region
      $region53: #{bottleneck_forward.1} parent=51 // pred_check
        %p811 = pneg %p210
      $region54: #{bottleneck_forward.1} parent=51 // pred_check_branch
        %813 = sbr.rel (%p811) target = $region56
      $region55: #{bottleneck_forward.1} parent=51 // pred_region
        _
      $region56: #{bottleneck_forward.1} parent=51 // pred_fallthru
        _
    $region52: #{bottleneck_forward.1} parent=5 // pred_fallthru
      _
    %p814 = scmp.le.s32.totalorder 2, %s14
    // Predicated region
    $region57: #{bottleneck_forward.1} parent=5 // pred_check
      %p815 = pneg %p814
    $region58: #{bottleneck_forward.1} parent=5 // pred_check_branch
      %817 = sbr.rel (%p815) target = $region60
    $region59: #{bottleneck_forward.1} parent=5 // pred_region
      %s818 = ssub.s32 %s14, 2
      // Predicated region
      $region61: #{bottleneck_forward.1} parent=59 // pred_check
        %p819 = pneg %p216
      $region62: #{bottleneck_forward.1} parent=59 // pred_check_branch
        %821 = sbr.rel (%p819) target = $region64
      $region63: #{bottleneck_forward.1} parent=59 // pred_region
        %p822 = scmp.lt.s32.totalorder %s20, 1
        %s823 = scalar_select %p822, %s20, 1
        %s824 = smul.addr %s823, 4
        %s825 = smul.addr %s824, 8
        %s826 = scalar_lea.vmem %s8, %s825
      $region64: #{bottleneck_forward.1} parent=59 // pred_fallthru
        _
    $region60: #{bottleneck_forward.1} parent=5 // pred_fallthru
      _
  $region6: #{bottleneck_forward.1} parent=0 // loop_footer
    %s18 = sadd.s32 1, %s14
  $region7: #{bottleneck_forward.1} parent=0 // loop_footer_branch
    %13 = sbr.rel target = $region3
  $region8: #{bottleneck_forward.1} parent=0 // loop_exit
    _

</llo_original>
